<compile_context>
chip_gen: v6e
topology: v6e:2x2x1
jax: 0.10.0
libtpu: 0.0.40
codegen_flags: <defaults>
</compile_context>

<pallas_src>
import functools

import jax
import jax.numpy as jnp
from jax import lax
from jax.experimental import pallas as pl
from jax.experimental.pallas import tpu as pltpu


def _attention_lstm_kernel(support_ref, queries_ref, wih_t_ref, whh_t_ref,
                           bias_ref, out_ref, *, unrolling_steps: int,
                           size: int):
    support = support_ref[...]          # [S, D]  bf16
    q = queries_ref[...]                # [B, D]  f32
    wih_t = wih_t_ref[...]              # [D, 4D] bf16
    whh_t = whh_t_ref[...]              # [D, 4D] bf16
    bias = bias_ref[...]                # [1, 4D] f32

    D = size
    q_bf = q.astype(jnp.bfloat16)

    # Queries are the LSTMCell "input" every step -> loop-invariant gate term.
    x_gates = jnp.dot(q_bf, wih_t, preferred_element_type=jnp.float32) + bias

    def step(carry):
        h_hat, c = carry
        h = h_hat + q                                            # skip connection (f32)

        # Attention over the support set: contract lane dim of both operands,
        # no transpose materialized.  bf16 in, f32 accumulate.
        att = lax.dot_general(h.astype(jnp.bfloat16), support,
                              (((1,), (1,)), ((), ())),
                              preferred_element_type=jnp.float32)  # [B, S]
        att = att - jnp.max(att, axis=1, keepdims=True)
        att = jnp.exp(att)
        att = att * pl.reciprocal(jnp.sum(att, axis=1, keepdims=True),
                                  approx=True)
        readout = jnp.dot(att.astype(jnp.bfloat16), support,
                          preferred_element_type=jnp.float32)      # [B, D]

        # LSTMCell(queries, (h + readout, c)) -- PyTorch gate order: i, f, g, o
        h_in = (h + readout).astype(jnp.bfloat16)
        gates = x_gates + jnp.dot(h_in, whh_t,
                                  preferred_element_type=jnp.float32)
        i_g = jax.nn.sigmoid(gates[:, 0 * D:1 * D])
        f_g = jax.nn.sigmoid(gates[:, 1 * D:2 * D])
        g_g = jnp.tanh(gates[:, 2 * D:3 * D])
        o_g = jax.nn.sigmoid(gates[:, 3 * D:4 * D])
        c_new = f_g * c + i_g * g_g
        h_hat_new = o_g * jnp.tanh(c_new)
        return h_hat_new, c_new

    h_hat = jnp.zeros_like(q)
    c = jnp.zeros_like(q)
    if unrolling_steps <= 4:
        for _ in range(unrolling_steps):
            h_hat, c = step((h_hat, c))
    else:
        h_hat, c = lax.fori_loop(0, unrolling_steps,
                                 lambda _, carry: step(carry), (h_hat, c))

    out_ref[...] = h_hat + q


@functools.partial(jax.jit, static_argnames=("unrolling_steps", "batch_block"))
def attention_lstm(support, queries, w_ih, w_hh, b_ih, b_hh, *,
                   unrolling_steps: int, batch_block=None):
    """support: [S, D]; queries: [B, D]; w_ih/w_hh: [4D, D]; b_ih/b_hh: [4D].
    Returns h: [B, D] (float32).  If `batch_block` divides B, the batch is
    tiled over a "parallel" grid axis (shards across v7x's two TensorCores)."""
    S, D = support.shape
    B, Dq = queries.shape
    if D != Dq:
        raise ValueError("Support and query set have different embedding dimension!")
    assert D % 128 == 0, "embedding dim must be lane-aligned (multiple of 128)"

    # bf16 MXU operands, f32 accumulate; bias/queries stay f32.
    support_bf = support.astype(jnp.bfloat16)
    q_f32 = queries.astype(jnp.float32)
    wih_t = jnp.transpose(w_ih).astype(jnp.bfloat16)          # [D, 4D]
    whh_t = jnp.transpose(w_hh).astype(jnp.bfloat16)          # [D, 4D]
    bias = (b_ih.astype(jnp.float32)
            + b_hh.astype(jnp.float32)).reshape(1, 4 * D)

    kernel = functools.partial(_attention_lstm_kernel,
                               unrolling_steps=unrolling_steps, size=D)

    if batch_block is None or batch_block >= B:
        # Small batch: everything VMEM-resident, no grid (no dummy pipeline level).
        return pl.pallas_call(
            kernel,
            out_shape=jax.ShapeDtypeStruct((B, D), jnp.float32),
            in_specs=[pl.BlockSpec(memory_space=pltpu.MemorySpace.VMEM)] * 5,
            out_specs=pl.BlockSpec(memory_space=pltpu.MemorySpace.VMEM),
        )(support_bf, q_f32, wih_t, whh_t, bias)

    assert B % batch_block == 0 and batch_block % 8 == 0
    rep = lambda shape: pl.BlockSpec(shape, lambda i: (0, 0))   # replicated operand
    return pl.pallas_call(
        kernel,
        out_shape=jax.ShapeDtypeStruct((B, D), jnp.float32),
        grid=(B // batch_block,),
        in_specs=[
            rep((S, D)),                                        # support
            pl.BlockSpec((batch_block, D), lambda i: (i, 0)),   # queries (blocked)
            rep((D, 4 * D)),                                    # W_ih^T
            rep((D, 4 * D)),                                    # W_hh^T
            rep((1, 4 * D)),                                    # bias
        ],
        out_specs=pl.BlockSpec((batch_block, D), lambda i: (i, 0)),
        compiler_params=pltpu.CompilerParams(
            dimension_semantics=("parallel",)),
    )(support_bf, q_f32, wih_t, whh_t, bias)


def _reference(support, queries, w_ih, w_hh, b_ih, b_hh, unrolling_steps):
    """Plain-JAX f32 reference mirroring the PyTorch forward."""
    B, D = queries.shape
    h_hat = jnp.zeros_like(queries)
    c = jnp.zeros((B, D), jnp.float32)
    for _ in range(unrolling_steps):
        h = h_hat + queries
        att = jax.nn.softmax(h @ support.T, axis=1)
        readout = att @ support
        h_in = h + readout
        gates = queries @ w_ih.T + b_ih + h_in @ w_hh.T + b_hh
        i_g, f_g, g_g, o_g = jnp.split(gates, 4, axis=1)
        i_g, f_g, o_g = map(jax.nn.sigmoid, (i_g, f_g, o_g))
        g_g = jnp.tanh(g_g)
        c = f_g * c + i_g * g_g
        h_hat = o_g * jnp.tanh(c)
    return h_hat + queries


if __name__ == "__main__":
    SIZE = 128             # embedding dim (= LSTM hidden size)
    N_SUPPORT = 16
    BATCH = 8
    UNROLLING_STEPS = 2

    key = jax.random.PRNGKey(0)
    k_sup, k_qry, k_wih, k_whh, k_bih, k_bhh, k_big = jax.random.split(key, 7)

    support = jax.random.normal(k_sup, (N_SUPPORT, SIZE), jnp.float32) * 0.5
    queries = jax.random.normal(k_qry, (BATCH, SIZE), jnp.float32) * 0.5

    # LSTMCell parameters (PyTorch shapes: weight_ih [4H, H], weight_hh [4H, H])
    scale = 1.0 / jnp.sqrt(SIZE)
    w_ih = jax.random.uniform(k_wih, (4 * SIZE, SIZE), jnp.float32, -scale, scale)
    w_hh = jax.random.uniform(k_whh, (4 * SIZE, SIZE), jnp.float32, -scale, scale)
    b_ih = jax.random.uniform(k_bih, (4 * SIZE,), jnp.float32, -scale, scale)
    b_hh = jax.random.uniform(k_bhh, (4 * SIZE,), jnp.float32, -scale, scale)

    # Small-batch path (no grid).
    out = attention_lstm(support, queries, w_ih, w_hh, b_ih, b_hh,
                         unrolling_steps=UNROLLING_STEPS)
    out = jax.block_until_ready(out)
    ref = _reference(support, queries, w_ih, w_hh, b_ih, b_hh, UNROLLING_STEPS)
    assert out.shape == (BATCH, SIZE)
    # bf16 MXU operands + approx reciprocal -> looser-than-f32 tolerance.
    assert jnp.allclose(out, ref, atol=5e-2, rtol=5e-2), "mismatch vs reference"

    # Larger batch exercising the batch-tiled "parallel" grid path (v7x megacore).
    BIG_BATCH = 256
    q_big = jax.random.normal(k_big, (BIG_BATCH, SIZE), jnp.float32) * 0.5
    out_big = attention_lstm(support, q_big, w_ih, w_hh, b_ih, b_hh,
                             unrolling_steps=UNROLLING_STEPS, batch_block=128)
    out_big = jax.block_until_ready(out_big)
    ref_big = _reference(support, q_big, w_ih, w_hh, b_ih, b_hh, UNROLLING_STEPS)
    assert out_big.shape == (BIG_BATCH, SIZE)
    assert jnp.allclose(out_big, ref_big, atol=5e-2, rtol=5e-2), "mismatch (batched)"

    print("KERNEL_OK")
</pallas_src>

<mosaic_0001>
module attributes {stable_mosaic.version = 11 : i64} {
  func.func @_attention_lstm_kernel(%arg0: memref<16x128xbf16, #tpu.memory_space<vmem>>, %arg1: memref<8x128xf32, #tpu.memory_space<vmem>>, %arg2: memref<128x512xbf16, #tpu.memory_space<vmem>>, %arg3: memref<128x512xbf16, #tpu.memory_space<vmem>>, %arg4: memref<1x512xf32, #tpu.memory_space<vmem>>, %arg5: memref<8x128xf32, #tpu.memory_space<vmem>>) attributes {dimension_semantics = [], scalar_prefetch = 0 : i64, scratch_operands = 0 : i64, tpu.core_type = #tpu.core_type<tc>} {
    %c0 = arith.constant 0 : index
    %c0_0 = arith.constant 0 : index
    %0 = vector.load %arg0[%c0, %c0_0] : memref<16x128xbf16, #tpu.memory_space<vmem>>, vector<16x128xbf16>
    %c0_1 = arith.constant 0 : index
    %c0_2 = arith.constant 0 : index
    %1 = vector.load %arg1[%c0_1, %c0_2] : memref<8x128xf32, #tpu.memory_space<vmem>>, vector<8x128xf32>
    %c0_3 = arith.constant 0 : index
    %c0_4 = arith.constant 0 : index
    %2 = vector.load %arg2[%c0_3, %c0_4] : memref<128x512xbf16, #tpu.memory_space<vmem>>, vector<128x512xbf16>
    %c0_5 = arith.constant 0 : index
    %c0_6 = arith.constant 0 : index
    %3 = vector.load %arg3[%c0_5, %c0_6] : memref<128x512xbf16, #tpu.memory_space<vmem>>, vector<128x512xbf16>
    %c0_7 = arith.constant 0 : index
    %c0_8 = arith.constant 0 : index
    %4 = vector.load %arg4[%c0_7, %c0_8] : memref<1x512xf32, #tpu.memory_space<vmem>>, vector<1x512xf32>
    %5 = arith.truncf %1 : vector<8x128xf32> to vector<8x128xbf16>
    %cst = arith.constant dense<0.000000e+00> : vector<8x512xf32>
    %6 = tpu.matmul %5, %2, %cst {dimension_numbers = #tpu.dot_dimension_numbers<[1], [0], [0], [1], [0, 0, 1, 1], [], []>} : vector<8x128xbf16>, vector<128x512xbf16>, vector<8x512xf32> -> vector<8x512xf32>
    %7 = vector.broadcast %4 : vector<1x512xf32> to vector<8x512xf32>
    %8 = arith.addf %6, %7 : vector<8x512xf32>
    %cst_9 = arith.constant 0.000000e+00 : f32
    %9 = vector.broadcast %cst_9 : f32 to vector<8x128xf32>
    %cst_10 = arith.constant 0.000000e+00 : f32
    %10 = vector.broadcast %cst_10 : f32 to vector<8x128xf32>
    %11 = arith.addf %9, %1 : vector<8x128xf32>
    %12 = arith.truncf %11 : vector<8x128xf32> to vector<8x128xbf16>
    %cst_11 = arith.constant dense<0.000000e+00> : vector<8x16xf32>
    %13 = tpu.matmul %12, %0, %cst_11 {dimension_numbers = #tpu.dot_dimension_numbers<[1], [1], [0], [0], [0, 0, 1, 0], [], []>} : vector<8x128xbf16>, vector<16x128xbf16>, vector<8x16xf32> -> vector<8x16xf32>
    %cst_12 = arith.constant dense<0xFF800000> : vector<8xf32>
    %14 = vector.multi_reduction <maximumf>, %13, %cst_12 [1] : vector<8x16xf32> to vector<8xf32>
    %15 = vector.shape_cast %14 : vector<8xf32> to vector<8x1xf32>
    %16 = vector.broadcast %15 : vector<8x1xf32> to vector<8x16xf32>
    %17 = arith.subf %13, %16 : vector<8x16xf32>
    %18 = math.exp %17 : vector<8x16xf32>
    %cst_13 = arith.constant dense<0.000000e+00> : vector<8xf32>
    %19 = vector.multi_reduction <add>, %18, %cst_13 [1] : vector<8x16xf32> to vector<8xf32>
    %20 = vector.shape_cast %19 : vector<8xf32> to vector<8x1xf32>
    %21 = tpu.reciprocal %20 {approx = true} : vector<8x1xf32> -> vector<8x1xf32>
    %22 = vector.broadcast %21 : vector<8x1xf32> to vector<8x16xf32>
    %23 = arith.mulf %18, %22 : vector<8x16xf32>
    %24 = arith.truncf %23 : vector<8x16xf32> to vector<8x16xbf16>
    %cst_14 = arith.constant dense<0.000000e+00> : vector<8x128xf32>
    %25 = tpu.matmul %24, %0, %cst_14 {dimension_numbers = #tpu.dot_dimension_numbers<[1], [0], [0], [1], [0, 0, 1, 1], [], []>} : vector<8x16xbf16>, vector<16x128xbf16>, vector<8x128xf32> -> vector<8x128xf32>
    %26 = arith.addf %11, %25 : vector<8x128xf32>
    %27 = arith.truncf %26 : vector<8x128xf32> to vector<8x128xbf16>
    %cst_15 = arith.constant dense<0.000000e+00> : vector<8x512xf32>
    %28 = tpu.matmul %27, %3, %cst_15 {dimension_numbers = #tpu.dot_dimension_numbers<[1], [0], [0], [1], [0, 0, 1, 1], [], []>} : vector<8x128xbf16>, vector<128x512xbf16>, vector<8x512xf32> -> vector<8x512xf32>
    %29 = arith.addf %8, %28 : vector<8x512xf32>
    %30 = vector.extract_strided_slice %29 {offsets = [0, 0], sizes = [8, 128], strides = [1, 1]} : vector<8x512xf32> to vector<8x128xf32>
    %31 = arith.negf %30 : vector<8x128xf32>
    %32 = math.exp %31 : vector<8x128xf32>
    %cst_16 = arith.constant 1.000000e+00 : f32
    %33 = vector.broadcast %cst_16 : f32 to vector<8x128xf32>
    %34 = arith.addf %33, %32 : vector<8x128xf32>
    %35 = arith.divf %33, %34 : vector<8x128xf32>
    %36 = vector.extract_strided_slice %29 {offsets = [0, 128], sizes = [8, 128], strides = [1, 1]} : vector<8x512xf32> to vector<8x128xf32>
    %37 = arith.negf %36 : vector<8x128xf32>
    %38 = math.exp %37 : vector<8x128xf32>
    %cst_17 = arith.constant 1.000000e+00 : f32
    %39 = vector.broadcast %cst_17 : f32 to vector<8x128xf32>
    %40 = arith.addf %39, %38 : vector<8x128xf32>
    %41 = arith.divf %39, %40 : vector<8x128xf32>
    %42 = vector.extract_strided_slice %29 {offsets = [0, 256], sizes = [8, 128], strides = [1, 1]} : vector<8x512xf32> to vector<8x128xf32>
    %43 = math.tanh %42 : vector<8x128xf32>
    %44 = vector.extract_strided_slice %29 {offsets = [0, 384], sizes = [8, 128], strides = [1, 1]} : vector<8x512xf32> to vector<8x128xf32>
    %45 = arith.negf %44 : vector<8x128xf32>
    %46 = math.exp %45 : vector<8x128xf32>
    %cst_18 = arith.constant 1.000000e+00 : f32
    %47 = vector.broadcast %cst_18 : f32 to vector<8x128xf32>
    %48 = arith.addf %47, %46 : vector<8x128xf32>
    %49 = arith.divf %47, %48 : vector<8x128xf32>
    %50 = arith.mulf %41, %10 : vector<8x128xf32>
    %51 = arith.mulf %35, %43 : vector<8x128xf32>
    %52 = arith.addf %50, %51 : vector<8x128xf32>
    %53 = math.tanh %52 : vector<8x128xf32>
    %54 = arith.mulf %49, %53 : vector<8x128xf32>
    %55 = arith.addf %54, %1 : vector<8x128xf32>
    %56 = arith.truncf %55 : vector<8x128xf32> to vector<8x128xbf16>
    %cst_19 = arith.constant dense<0.000000e+00> : vector<8x16xf32>
    %57 = tpu.matmul %56, %0, %cst_19 {dimension_numbers = #tpu.dot_dimension_numbers<[1], [1], [0], [0], [0, 0, 1, 0], [], []>} : vector<8x128xbf16>, vector<16x128xbf16>, vector<8x16xf32> -> vector<8x16xf32>
    %cst_20 = arith.constant dense<0xFF800000> : vector<8xf32>
    %58 = vector.multi_reduction <maximumf>, %57, %cst_20 [1] : vector<8x16xf32> to vector<8xf32>
    %59 = vector.shape_cast %58 : vector<8xf32> to vector<8x1xf32>
    %60 = vector.broadcast %59 : vector<8x1xf32> to vector<8x16xf32>
    %61 = arith.subf %57, %60 : vector<8x16xf32>
    %62 = math.exp %61 : vector<8x16xf32>
    %cst_21 = arith.constant dense<0.000000e+00> : vector<8xf32>
    %63 = vector.multi_reduction <add>, %62, %cst_21 [1] : vector<8x16xf32> to vector<8xf32>
    %64 = vector.shape_cast %63 : vector<8xf32> to vector<8x1xf32>
    %65 = tpu.reciprocal %64 {approx = true} : vector<8x1xf32> -> vector<8x1xf32>
    %66 = vector.broadcast %65 : vector<8x1xf32> to vector<8x16xf32>
    %67 = arith.mulf %62, %66 : vector<8x16xf32>
    %68 = arith.truncf %67 : vector<8x16xf32> to vector<8x16xbf16>
    %cst_22 = arith.constant dense<0.000000e+00> : vector<8x128xf32>
    %69 = tpu.matmul %68, %0, %cst_22 {dimension_numbers = #tpu.dot_dimension_numbers<[1], [0], [0], [1], [0, 0, 1, 1], [], []>} : vector<8x16xbf16>, vector<16x128xbf16>, vector<8x128xf32> -> vector<8x128xf32>
    %70 = arith.addf %55, %69 : vector<8x128xf32>
    %71 = arith.truncf %70 : vector<8x128xf32> to vector<8x128xbf16>
    %cst_23 = arith.constant dense<0.000000e+00> : vector<8x512xf32>
    %72 = tpu.matmul %71, %3, %cst_23 {dimension_numbers = #tpu.dot_dimension_numbers<[1], [0], [0], [1], [0, 0, 1, 1], [], []>} : vector<8x128xbf16>, vector<128x512xbf16>, vector<8x512xf32> -> vector<8x512xf32>
    %73 = arith.addf %8, %72 : vector<8x512xf32>
    %74 = vector.extract_strided_slice %73 {offsets = [0, 0], sizes = [8, 128], strides = [1, 1]} : vector<8x512xf32> to vector<8x128xf32>
    %75 = arith.negf %74 : vector<8x128xf32>
    %76 = math.exp %75 : vector<8x128xf32>
    %cst_24 = arith.constant 1.000000e+00 : f32
    %77 = vector.broadcast %cst_24 : f32 to vector<8x128xf32>
    %78 = arith.addf %77, %76 : vector<8x128xf32>
    %79 = arith.divf %77, %78 : vector<8x128xf32>
    %80 = vector.extract_strided_slice %73 {offsets = [0, 128], sizes = [8, 128], strides = [1, 1]} : vector<8x512xf32> to vector<8x128xf32>
    %81 = arith.negf %80 : vector<8x128xf32>
    %82 = math.exp %81 : vector<8x128xf32>
    %cst_25 = arith.constant 1.000000e+00 : f32
    %83 = vector.broadcast %cst_25 : f32 to vector<8x128xf32>
    %84 = arith.addf %83, %82 : vector<8x128xf32>
    %85 = arith.divf %83, %84 : vector<8x128xf32>
    %86 = vector.extract_strided_slice %73 {offsets = [0, 256], sizes = [8, 128], strides = [1, 1]} : vector<8x512xf32> to vector<8x128xf32>
    %87 = math.tanh %86 : vector<8x128xf32>
    %88 = vector.extract_strided_slice %73 {offsets = [0, 384], sizes = [8, 128], strides = [1, 1]} : vector<8x512xf32> to vector<8x128xf32>
    %89 = arith.negf %88 : vector<8x128xf32>
    %90 = math.exp %89 : vector<8x128xf32>
    %cst_26 = arith.constant 1.000000e+00 : f32
    %91 = vector.broadcast %cst_26 : f32 to vector<8x128xf32>
    %92 = arith.addf %91, %90 : vector<8x128xf32>
    %93 = arith.divf %91, %92 : vector<8x128xf32>
    %94 = arith.mulf %85, %52 : vector<8x128xf32>
    %95 = arith.mulf %79, %87 : vector<8x128xf32>
    %96 = arith.addf %94, %95 : vector<8x128xf32>
    %97 = math.tanh %96 : vector<8x128xf32>
    %98 = arith.mulf %93, %97 : vector<8x128xf32>
    %99 = arith.addf %98, %1 : vector<8x128xf32>
    %c0_27 = arith.constant 0 : index
    %c0_28 = arith.constant 0 : index
    %100 = vector.load %arg5[%c0_27, %c0_28] : memref<8x128xf32, #tpu.memory_space<vmem>>, vector<8x128xf32>
    tpu.vector_store %arg5[%c0_27, %c0_28], %99 {strides = array<i32>} : memref<8x128xf32, #tpu.memory_space<vmem>>, vector<8x128xf32>,
    return
  }
}

</mosaic_0001>

<llo_original>
// kernel: attention_lstm.1
$region0: #{attention_lstm.1}
  #allocation0 [shape = 'u32[]', space=smem, size = 0x4, offset = 0x4, fixed_abs, tag = 'smem constant byte address 0x4 - core index']
  #allocation1 [shape = 'u32[144,128]{1,0:T(1,128)}', space=vmem, size = 0x12000, scoped, tag = 'internal scratch']
  %s0 = inlined_call_operand.vmem [shape: bf16[16,128], index: 0, kind: input, shape index: {}]
  %s1 = inlined_call_operand.vmem [shape: f32[8,128], index: 1, kind: input, shape index: {}]
  %s2 = inlined_call_operand.vmem [shape: bf16[128,512], index: 2, kind: input, shape index: {}]
  %s3 = inlined_call_operand.vmem [shape: bf16[128,512], index: 3, kind: input, shape index: {}]
  %s4 = inlined_call_operand.vmem [shape: f32[1,512], index: 4, kind: input, shape index: {}]
  %s5 = inlined_call_operand.hbm [shape: f32[8,128], index: 5, kind: output, shape index: {}]
  %s6 = sld [smem:[#allocation0]]
  $region30: #{attention_lstm.1} parent=0
    _
  %s8 = ssub.s32 1, %s6
  %s9 = scalar_select 0, %s8, %s6
  $region1: #{attention_lstm.1} parent=0
    #allocation2 [shape = 'u8[4096]{0}', space=vmem, size = 0x1000, scoped, tag = 'output window, operand 0, single buffered']
    #allocation3 [shape = 's32[1]{0}', space=sflag, size = 0x4, scoped, tag = 'scoped memory for attention_lstm.1']
    %10 = vsyncpa [#allocation3], 0
    // Predicated region
    $region2: #{attention_lstm.1} parent=1 // pred_check
      _
    $region3: #{attention_lstm.1} parent=1 // pred_check_branch
      %12 = sbr.rel (0) target = $region5
    $region4: #{attention_lstm.1} parent=1 // pred_region
      _
    $region5: #{attention_lstm.1} parent=1 // pred_fallthru
      _
    // Predicated region
    $region6: #{attention_lstm.1} parent=1 // pred_check
      _
    $region7: #{attention_lstm.1} parent=1 // pred_check_branch
      %14 = sbr.rel (0) target = $region9
    $region8: #{attention_lstm.1} parent=1 // pred_region
      _
    $region9: #{attention_lstm.1} parent=1 // pred_fallthru
      _
    // Predicated region
    $region10: #{attention_lstm.1} parent=1 // pred_check
      _
    $region11: #{attention_lstm.1} parent=1 // pred_check_branch
      %16 = sbr.rel (0) target = $region13
    $region12: #{attention_lstm.1} parent=1 // pred_region
      _
    $region13: #{attention_lstm.1} parent=1 // pred_fallthru
      _
    // Predicated region
    $region14: #{attention_lstm.1} parent=1 // pred_check
      _
    $region15: #{attention_lstm.1} parent=1 // pred_check_branch
      %18 = sbr.rel (0) target = $region17
    $region16: #{attention_lstm.1} parent=1 // pred_region
      _
    $region17: #{attention_lstm.1} parent=1 // pred_fallthru
      _
    // Predicated region
    $region18: #{attention_lstm.1} parent=1 // pred_check
      _
    $region19: #{attention_lstm.1} parent=1 // pred_check_branch
      %20 = sbr.rel (0) target = $region21
    $region20: #{attention_lstm.1} parent=1 // pred_region
      _
    $region21: #{attention_lstm.1} parent=1 // pred_fallthru
      _
    %v22 = vld [vmem:[%s0] sm:$0xf]
    %v23 = vld [vmem:[%s0 + $0x4] sm:$0xf]
    %v24 = vld [vmem:[%s1] sm:$0xff]
    %v25 = vld [vmem:[%s2] sm:$0xff]
    %v26 = vld [vmem:[%s2 + $0x8] sm:$0xff]
    %v27 = vld [vmem:[%s2 + $0x10] sm:$0xff]
    %v28 = vld [vmem:[%s2 + $0x18] sm:$0xff]
    %v29 = vld [vmem:[%s2 + $0x20] sm:$0xff]
    %v30 = vld [vmem:[%s2 + $0x28] sm:$0xff]
    %v31 = vld [vmem:[%s2 + $0x30] sm:$0xff]
    %v32 = vld [vmem:[%s2 + $0x38] sm:$0xff]
    %v33 = vld [vmem:[%s2 + $0x40] sm:$0xff]
    %v34 = vld [vmem:[%s2 + $0x48] sm:$0xff]
    %v35 = vld [vmem:[%s2 + $0x50] sm:$0xff]
    %v36 = vld [vmem:[%s2 + $0x58] sm:$0xff]
    %v37 = vld [vmem:[%s2 + $0x60] sm:$0xff]
    %v38 = vld [vmem:[%s2 + $0x68] sm:$0xff]
    %v39 = vld [vmem:[%s2 + $0x70] sm:$0xff]
    %v40 = vld [vmem:[%s2 + $0x78] sm:$0xff]
    %v41 = vld [vmem:[%s2 + $0x80] sm:$0xff]
    %v42 = vld [vmem:[%s2 + $0x88] sm:$0xff]
    %v43 = vld [vmem:[%s2 + $0x90] sm:$0xff]
    %v44 = vld [vmem:[%s2 + $0x98] sm:$0xff]
    %v45 = vld [vmem:[%s2 + $0xa0] sm:$0xff]
    %v46 = vld [vmem:[%s2 + $0xa8] sm:$0xff]
    %v47 = vld [vmem:[%s2 + $0xb0] sm:$0xff]
    %v48 = vld [vmem:[%s2 + $0xb8] sm:$0xff]
    %v49 = vld [vmem:[%s2 + $0xc0] sm:$0xff]
    %v50 = vld [vmem:[%s2 + $0xc8] sm:$0xff]
    %v51 = vld [vmem:[%s2 + $0xd0] sm:$0xff]
    %v52 = vld [vmem:[%s2 + $0xd8] sm:$0xff]
    %v53 = vld [vmem:[%s2 + $0xe0] sm:$0xff]
    %v54 = vld [vmem:[%s2 + $0xe8] sm:$0xff]
    %v55 = vld [vmem:[%s2 + $0xf0] sm:$0xff]
    %v56 = vld [vmem:[%s2 + $0xf8] sm:$0xff]
    %v57 = vld [vmem:[%s3] sm:$0xff]
    %v58 = vld [vmem:[%s3 + $0x8] sm:$0xff]
    %v59 = vld [vmem:[%s3 + $0x10] sm:$0xff]
    %v60 = vld [vmem:[%s3 + $0x18] sm:$0xff]
    %v61 = vld [vmem:[%s3 + $0x20] sm:$0xff]
    %v62 = vld [vmem:[%s3 + $0x28] sm:$0xff]
    %v63 = vld [vmem:[%s3 + $0x30] sm:$0xff]
    %v64 = vld [vmem:[%s3 + $0x38] sm:$0xff]
    %v65 = vld [vmem:[%s3 + $0x40] sm:$0xff]
    %v66 = vld [vmem:[%s3 + $0x48] sm:$0xff]
    %v67 = vld [vmem:[%s3 + $0x50] sm:$0xff]
    %v68 = vld [vmem:[%s3 + $0x58] sm:$0xff]
    %v69 = vld [vmem:[%s3 + $0x60] sm:$0xff]
    %v70 = vld [vmem:[%s3 + $0x68] sm:$0xff]
    %v71 = vld [vmem:[%s3 + $0x70] sm:$0xff]
    %v72 = vld [vmem:[%s3 + $0x78] sm:$0xff]
    %v73 = vld [vmem:[%s3 + $0x80] sm:$0xff]
    %v74 = vld [vmem:[%s3 + $0x88] sm:$0xff]
    %v75 = vld [vmem:[%s3 + $0x90] sm:$0xff]
    %v76 = vld [vmem:[%s3 + $0x98] sm:$0xff]
    %v77 = vld [vmem:[%s3 + $0xa0] sm:$0xff]
    %v78 = vld [vmem:[%s3 + $0xa8] sm:$0xff]
    %v79 = vld [vmem:[%s3 + $0xb0] sm:$0xff]
    %v80 = vld [vmem:[%s3 + $0xb8] sm:$0xff]
    %v81 = vld [vmem:[%s3 + $0xc0] sm:$0xff]
    %v82 = vld [vmem:[%s3 + $0xc8] sm:$0xff]
    %v83 = vld [vmem:[%s3 + $0xd0] sm:$0xff]
    %v84 = vld [vmem:[%s3 + $0xd8] sm:$0xff]
    %v85 = vld [vmem:[%s3 + $0xe0] sm:$0xff]
    %v86 = vld [vmem:[%s3 + $0xe8] sm:$0xff]
    %v87 = vld [vmem:[%s3 + $0xf0] sm:$0xff]
    %v88 = vld [vmem:[%s3 + $0xf8] sm:$0xff]
    %v89 = vld [vmem:[%s4] sm:$0xf]
    %v90 = vpack.c.bf16 %v24, %v24
    %v92 = vlaneseq
    %v93 = vshrl.u32 %v92, 7
    %v94 = vsub.s32 0, %v93
    %v95 = vrot.slane %v89, %v94
    %v96 = vlaneseq
    %v97 = vshrl.u32 %v96, 7
    %v98 = vsub.s32 1, %v97
    %v99 = vrot.slane %v89, %v98
    %v100 = vlaneseq
    %v101 = vshrl.u32 %v100, 7
    %v102 = vsub.s32 2, %v101
    %v103 = vrot.slane %v89, %v102
    %v104 = vlaneseq
    %v105 = vshrl.u32 %v104, 7
    %v106 = vsub.s32 3, %v105
    %v107 = vrot.slane %v89, %v106
    %v144 = vunpack.c.l.b16 %v25
    %v145 = vunpack.c.h.b16 %v25
    %v146 = vunpack.c.l.b16 %v26
    %v147 = vunpack.c.h.b16 %v26
    %v148 = vunpack.c.l.b16 %v27
    %v149 = vunpack.c.h.b16 %v27
    %v150 = vunpack.c.l.b16 %v28
    %v151 = vunpack.c.h.b16 %v28
    %v152 = vunpack.c.l.b16 %v29
    %v153 = vunpack.c.h.b16 %v29
    %v154 = vunpack.c.l.b16 %v30
    %v155 = vunpack.c.h.b16 %v30
    %v156 = vunpack.c.l.b16 %v31
    %v157 = vunpack.c.h.b16 %v31
    %v158 = vunpack.c.l.b16 %v32
    %v159 = vunpack.c.h.b16 %v32
    %v160 = vunpack.c.l.b16 %v33
    %v161 = vunpack.c.h.b16 %v33
    %v162 = vunpack.c.l.b16 %v34
    %v163 = vunpack.c.h.b16 %v34
    %v164 = vunpack.c.l.b16 %v35
    %v165 = vunpack.c.h.b16 %v35
    %v166 = vunpack.c.l.b16 %v36
    %v167 = vunpack.c.h.b16 %v36
    %v168 = vunpack.c.l.b16 %v37
    %v169 = vunpack.c.h.b16 %v37
    %v170 = vunpack.c.l.b16 %v38
    %v171 = vunpack.c.h.b16 %v38
    %v172 = vunpack.c.l.b16 %v39
    %v173 = vunpack.c.h.b16 %v39
    %v174 = vunpack.c.l.b16 %v40
    %v175 = vunpack.c.h.b16 %v40
    %v176 = vunpack.c.l.b16 %v41
    %v177 = vunpack.c.h.b16 %v41
    %v178 = vunpack.c.l.b16 %v42
    %v179 = vunpack.c.h.b16 %v42
    %v180 = vunpack.c.l.b16 %v43
    %v181 = vunpack.c.h.b16 %v43
    %v182 = vunpack.c.l.b16 %v44
    %v183 = vunpack.c.h.b16 %v44
    %v184 = vunpack.c.l.b16 %v45
    %v185 = vunpack.c.h.b16 %v45
    %v186 = vunpack.c.l.b16 %v46
    %v187 = vunpack.c.h.b16 %v46
    %v188 = vunpack.c.l.b16 %v47
    %v189 = vunpack.c.h.b16 %v47
    %v190 = vunpack.c.l.b16 %v48
    %v191 = vunpack.c.h.b16 %v48
    %v192 = vunpack.c.l.b16 %v49
    %v193 = vunpack.c.h.b16 %v49
    %v194 = vunpack.c.l.b16 %v50
    %v195 = vunpack.c.h.b16 %v50
    %v196 = vunpack.c.l.b16 %v51
    %v197 = vunpack.c.h.b16 %v51
    %v198 = vunpack.c.l.b16 %v52
    %v199 = vunpack.c.h.b16 %v52
    %v200 = vunpack.c.l.b16 %v53
    %v201 = vunpack.c.h.b16 %v53
    %v202 = vunpack.c.l.b16 %v54
    %v203 = vunpack.c.h.b16 %v54
    %v204 = vunpack.c.l.b16 %v55
    %v205 = vunpack.c.h.b16 %v55
    %v206 = vunpack.c.l.b16 %v56
    %v207 = vunpack.c.h.b16 %v56
    %v208 = vpack.c.b16 %v148, %v144
    %v209 = vpack.c.b16 %v149, %v145
    %v210 = vpack.c.b16 %v150, %v146
    %v211 = vpack.c.b16 %v151, %v147
    %v212 = vpack.c.b16 %v156, %v152
    %v213 = vpack.c.b16 %v157, %v153
    %v214 = vpack.c.b16 %v158, %v154
    %v215 = vpack.c.b16 %v159, %v155
    %v216 = vpack.c.b16 %v164, %v160
    %v217 = vpack.c.b16 %v165, %v161
    %v218 = vpack.c.b16 %v166, %v162
    %v219 = vpack.c.b16 %v167, %v163
    %v220 = vpack.c.b16 %v172, %v168
    %v221 = vpack.c.b16 %v173, %v169
    %v222 = vpack.c.b16 %v174, %v170
    %v223 = vpack.c.b16 %v175, %v171
    %v224 = vpack.c.b16 %v180, %v176
    %v225 = vpack.c.b16 %v181, %v177
    %v226 = vpack.c.b16 %v182, %v178
    %v227 = vpack.c.b16 %v183, %v179
    %v228 = vpack.c.b16 %v188, %v184
    %v229 = vpack.c.b16 %v189, %v185
    %v230 = vpack.c.b16 %v190, %v186
    %v231 = vpack.c.b16 %v191, %v187
    %v232 = vpack.c.b16 %v196, %v192
    %v233 = vpack.c.b16 %v197, %v193
    %v234 = vpack.c.b16 %v198, %v194
    %v235 = vpack.c.b16 %v199, %v195
    %v236 = vpack.c.b16 %v204, %v200
    %v237 = vpack.c.b16 %v205, %v201
    %v238 = vpack.c.b16 %v206, %v202
    %v239 = vpack.c.b16 %v207, %v203
    %272 = vmatprep.subr.bf16.mxu0 %v237
    %273 = vmatpush1.bf16.msra.mxu0 %v236
    %274 = vmatprep.subr.bf16.mxu0 %v233
    %275 = vmatpush1.bf16.msra.mxu0 %v232
    %276 = vmatprep.subr.bf16.mxu0 %v229
    %277 = vmatpush1.bf16.msra.mxu0 %v228
    %278 = vmatprep.subr.bf16.mxu0 %v225
    %279 = vmatpush1.bf16.msra.mxu0 %v224
    %280 = vmatprep.subr.bf16.mxu0 %v221
    %281 = vmatpush1.bf16.msra.mxu0 %v220
    %282 = vmatprep.subr.bf16.mxu0 %v217
    %283 = vmatpush1.bf16.msra.mxu0 %v216
    %284 = vmatprep.subr.bf16.mxu0 %v213
    %285 = vmatpush1.bf16.msra.mxu0 %v212
    %286 = vmatprep.subr.bf16.mxu0 %v209
    %287 = vmatpush1.bf16.msra.mxu0 %v208
    %288 = vmatprep.subr.bf16.mxu0 0
    %289 = vmatpush2.bf16.msra.mxu0 0
    %290 = vmatprep.subr.bf16.mxu0 0
    %291 = vmatpush2.bf16.msra.mxu0 0
    %292 = vmatprep.subr.bf16.mxu0 0
    %293 = vmatpush2.bf16.msra.mxu0 0
    %294 = vmatprep.subr.bf16.mxu0 0
    %295 = vmatpush2.bf16.msra.mxu0 0
    %296 = vmatprep.subr.bf16.mxu0 0
    %297 = vmatpush2.bf16.msra.mxu0 0
    %298 = vmatprep.subr.bf16.mxu0 0
    %299 = vmatpush2.bf16.msra.mxu0 0
    %300 = vmatprep.subr.bf16.mxu0 0
    %301 = vmatpush2.bf16.msra.mxu0 0
    %302 = vmatprep.subr.bf16.mxu0 0
    %303 = vmatpush2.bf16.msra.mxu0 0
    %304 = vmatprep.mubr.bf16.mxu0 0
    %305 = vmatmul.mubr.bf16.gmra.mxu0 %v90
    %v306 = vpop.f32.mrf.mxu0
    %v307 = vadd.f32 %v95, %v306
    %v308 = vpop.f32.mrf.mxu0
    %v309 = vadd.f32 %v99, %v308
    %v310 = vpop.f32.mrf.mxu0
    %v311 = vpop.f32.mrf.mxu0
    %312 = vdwg.mxu0
    %313 = vmatprep.subr.bf16.mxu0 %v239
    %314 = vmatpush1.bf16.msra.mxu0 %v238
    %315 = vmatprep.subr.bf16.mxu0 %v235
    %316 = vmatpush1.bf16.msra.mxu0 %v234
    %317 = vmatprep.subr.bf16.mxu0 %v231
    %318 = vmatpush1.bf16.msra.mxu0 %v230
    %319 = vmatprep.subr.bf16.mxu0 %v227
    %320 = vmatpush1.bf16.msra.mxu0 %v226
    %321 = vmatprep.subr.bf16.mxu0 %v223
    %322 = vmatpush1.bf16.msra.mxu0 %v222
    %323 = vmatprep.subr.bf16.mxu0 %v219
    %324 = vmatpush1.bf16.msra.mxu0 %v218
    %325 = vmatprep.subr.bf16.mxu0 %v215
    %326 = vmatpush1.bf16.msra.mxu0 %v214
    %327 = vmatprep.subr.bf16.mxu0 %v211
    %328 = vmatpush1.bf16.msra.mxu0 %v210
    %329 = vmatprep.subr.bf16.mxu0 0
    %330 = vmatpush2.bf16.msra.mxu0 0
    %331 = vmatprep.subr.bf16.mxu0 0
    %332 = vmatpush2.bf16.msra.mxu0 0
    %333 = vmatprep.subr.bf16.mxu0 0
    %334 = vmatpush2.bf16.msra.mxu0 0
    %335 = vmatprep.subr.bf16.mxu0 0
    %336 = vmatpush2.bf16.msra.mxu0 0
    %337 = vmatprep.subr.bf16.mxu0 0
    %338 = vmatpush2.bf16.msra.mxu0 0
    %339 = vmatprep.subr.bf16.mxu0 0
    %340 = vmatpush2.bf16.msra.mxu0 0
    %341 = vmatprep.subr.bf16.mxu0 0
    %342 = vmatpush2.bf16.msra.mxu0 0
    %343 = vmatprep.subr.bf16.mxu0 0
    %344 = vmatpush2.bf16.msra.mxu0 0
    %345 = vmatprep.mubr.bf16.mxu0 0
    %346 = vmatmul.mubr.bf16.gmra.mxu0 %v90
    %v347 = vpop.f32.mrf.mxu0
    %v348 = vadd.f32 %v103, %v347
    %v349 = vpop.f32.mrf.mxu0
    %v350 = vadd.f32 %v107, %v349
    %v351 = vpop.f32.mrf.mxu0
    %v352 = vpop.f32.mrf.mxu0
    %353 = vdwg.mxu0
    %v354 = vadd.f32 %v24, 0.0
    %v355 = vpack.c.bf16 %v354, %v354
    %v358 = vunpack.c.l.b16 %v22
    %v359 = vunpack.c.l.b16 %v23
    %v360 = vpack.c.b16 %v359, %v358
    %362 = vmatprep.subr.bf16.mxu0 0
    %363 = vmatpush1.bf16.xpose.msra.mxu0 0
    %364 = vmatprep.subr.bf16.mxu0 0
    %365 = vmatpush1.bf16.xpose.msra.mxu0 0
    %366 = vmatprep.subr.bf16.mxu0 0
    %367 = vmatpush1.bf16.xpose.msra.mxu0 0
    %368 = vmatprep.subr.bf16.mxu0 0
    %369 = vmatpush1.bf16.xpose.msra.mxu0 0
    %370 = vmatprep.subr.bf16.mxu0 0
    %371 = vmatpush1.bf16.xpose.msra.mxu0 0
    %372 = vmatprep.subr.bf16.mxu0 0
    %373 = vmatpush1.bf16.xpose.msra.mxu0 0
    %374 = vmatprep.subr.bf16.mxu0 0
    %375 = vmatpush1.bf16.xpose.msra.mxu0 0
    %376 = vmatprep.subr.bf16.mxu0 0
    %377 = vmatpush1.bf16.xpose.msra.mxu0 %v360
    %378 = vmatprep.subr.bf16.mxu0 0
    %379 = vmatpush2.bf16.xpose.msra.mxu0 0
    %380 = vmatprep.subr.bf16.mxu0 0
    %381 = vmatpush2.bf16.xpose.msra.mxu0 0
    %382 = vmatprep.subr.bf16.mxu0 0
    %383 = vmatpush2.bf16.xpose.msra.mxu0 0
    %384 = vmatprep.subr.bf16.mxu0 0
    %385 = vmatpush2.bf16.xpose.msra.mxu0 0
    %386 = vmatprep.subr.bf16.mxu0 0
    %387 = vmatpush2.bf16.xpose.msra.mxu0 0
    %388 = vmatprep.subr.bf16.mxu0 0
    %389 = vmatpush2.bf16.xpose.msra.mxu0 0
    %390 = vmatprep.subr.bf16.mxu0 0
    %391 = vmatpush2.bf16.xpose.msra.mxu0 0
    %392 = vmatprep.subr.bf16.mxu0 0
    %393 = vmatpush2.bf16.xpose.msra.mxu0 0
    %394 = vmatprep.mubr.bf16.mxu0 0
    %395 = vmatmul.mubr.bf16.gmra.mxu0 %v355
    %v396 = vpop.f32.mrf.mxu0
    %v397 = vadd.f32 0.0, %v396
    %v398 = vpop.f32.mrf.mxu0
    %v399 = vpop.f32.mrf.mxu0
    %v400 = vpop.f32.mrf.mxu0
    %401 = vdwg.mxu0
    %vm402 = vcmask 130048
    %v403 = vsel %vm402, %v397, -inf
    %404 = vmax.xlane.f32.xlu0 %v403
    %v405 = vpop.xlane.xlu0 %404
    %v406 = vsub.f32 %v397, %v405
    %v407 = vmul.f32 %v406, 1.442695
    %v408 = vpow.pop %v407
    %v409 = vsel %vm402, %v408, 0.0
    %410 = vadd.xlane.f32.xlu0 %v409
    %v411 = vpop.xlane.xlu0 %410
    %v412 = vrcp.pop %v411
    %v413 = vmul.f32 %v408, %v412
    %v414 = vpack.c.bf16 %v413, %v413
    %v416 = vsel %vm402, %v414, 0
    %418 = vmatprep.subr.bf16.mxu0 0
    %419 = vmatpush1.bf16.msra.mxu0 0
    %420 = vmatprep.subr.bf16.mxu0 0
    %421 = vmatpush1.bf16.msra.mxu0 0
    %422 = vmatprep.subr.bf16.mxu0 0
    %423 = vmatpush1.bf16.msra.mxu0 0
    %424 = vmatprep.subr.bf16.mxu0 0
    %425 = vmatpush1.bf16.msra.mxu0 0
    %426 = vmatprep.subr.bf16.mxu0 0
    %427 = vmatpush1.bf16.msra.mxu0 0
    %428 = vmatprep.subr.bf16.mxu0 0
    %429 = vmatpush1.bf16.msra.mxu0 0
    %430 = vmatprep.subr.bf16.mxu0 0
    %431 = vmatpush1.bf16.msra.mxu0 0
    %432 = vmatprep.subr.bf16.mxu0 0
    %433 = vmatpush1.bf16.msra.mxu0 %v360
    %434 = vmatprep.subr.bf16.mxu0 0
    %435 = vmatpush2.bf16.msra.mxu0 0
    %436 = vmatprep.subr.bf16.mxu0 0
    %437 = vmatpush2.bf16.msra.mxu0 0
    %438 = vmatprep.subr.bf16.mxu0 0
    %439 = vmatpush2.bf16.msra.mxu0 0
    %440 = vmatprep.subr.bf16.mxu0 0
    %441 = vmatpush2.bf16.msra.mxu0 0
    %442 = vmatprep.subr.bf16.mxu0 0
    %443 = vmatpush2.bf16.msra.mxu0 0
    %444 = vmatprep.subr.bf16.mxu0 0
    %445 = vmatpush2.bf16.msra.mxu0 0
    %446 = vmatprep.subr.bf16.mxu0 0
    %447 = vmatpush2.bf16.msra.mxu0 0
    %448 = vmatprep.subr.bf16.mxu0 0
    %449 = vmatpush2.bf16.msra.mxu0 0
    %450 = vmatprep.mubr.bf16.mxu0 0
    %451 = vmatmul.mubr.bf16.gmra.mxu0 %v416
    %v452 = vpop.f32.mrf.mxu0
    %v453 = vadd.f32 0.0, %v452
    %v454 = vpop.f32.mrf.mxu0
    %v455 = vpop.f32.mrf.mxu0
    %v456 = vpop.f32.mrf.mxu0
    %457 = vdwg.mxu0
    %v458 = vadd.f32 %v354, %v453
    %v459 = vpack.c.bf16 %v458, %v458
    %v492 = vunpack.c.l.b16 %v57
    %v493 = vunpack.c.h.b16 %v57
    %v494 = vunpack.c.l.b16 %v58
    %v495 = vunpack.c.h.b16 %v58
    %v496 = vunpack.c.l.b16 %v59
    %v497 = vunpack.c.h.b16 %v59
    %v498 = vunpack.c.l.b16 %v60
    %v499 = vunpack.c.h.b16 %v60
    %v500 = vunpack.c.l.b16 %v61
    %v501 = vunpack.c.h.b16 %v61
    %v502 = vunpack.c.l.b16 %v62
    %v503 = vunpack.c.h.b16 %v62
    %v504 = vunpack.c.l.b16 %v63
    %v505 = vunpack.c.h.b16 %v63
    %v506 = vunpack.c.l.b16 %v64
    %v507 = vunpack.c.h.b16 %v64
    %v508 = vunpack.c.l.b16 %v65
    %v509 = vunpack.c.h.b16 %v65
    %v510 = vunpack.c.l.b16 %v66
    %v511 = vunpack.c.h.b16 %v66
    %v512 = vunpack.c.l.b16 %v67
    %v513 = vunpack.c.h.b16 %v67
    %v514 = vunpack.c.l.b16 %v68
    %v515 = vunpack.c.h.b16 %v68
    %v516 = vunpack.c.l.b16 %v69
    %v517 = vunpack.c.h.b16 %v69
    %v518 = vunpack.c.l.b16 %v70
    %v519 = vunpack.c.h.b16 %v70
    %v520 = vunpack.c.l.b16 %v71
    %v521 = vunpack.c.h.b16 %v71
    %v522 = vunpack.c.l.b16 %v72
    %v523 = vunpack.c.h.b16 %v72
    %v524 = vunpack.c.l.b16 %v73
    %v525 = vunpack.c.h.b16 %v73
    %v526 = vunpack.c.l.b16 %v74
    %v527 = vunpack.c.h.b16 %v74
    %v528 = vunpack.c.l.b16 %v75
    %v529 = vunpack.c.h.b16 %v75
    %v530 = vunpack.c.l.b16 %v76
    %v531 = vunpack.c.h.b16 %v76
    %v532 = vunpack.c.l.b16 %v77
    %v533 = vunpack.c.h.b16 %v77
    %v534 = vunpack.c.l.b16 %v78
    %v535 = vunpack.c.h.b16 %v78
    %v536 = vunpack.c.l.b16 %v79
    %v537 = vunpack.c.h.b16 %v79
    %v538 = vunpack.c.l.b16 %v80
    %v539 = vunpack.c.h.b16 %v80
    %v540 = vunpack.c.l.b16 %v81
    %v541 = vunpack.c.h.b16 %v81
    %v542 = vunpack.c.l.b16 %v82
    %v543 = vunpack.c.h.b16 %v82
    %v544 = vunpack.c.l.b16 %v83
    %v545 = vunpack.c.h.b16 %v83
    %v546 = vunpack.c.l.b16 %v84
    %v547 = vunpack.c.h.b16 %v84
    %v548 = vunpack.c.l.b16 %v85
    %v549 = vunpack.c.h.b16 %v85
    %v550 = vunpack.c.l.b16 %v86
    %v551 = vunpack.c.h.b16 %v86
    %v552 = vunpack.c.l.b16 %v87
    %v553 = vunpack.c.h.b16 %v87
    %v554 = vunpack.c.l.b16 %v88
    %v555 = vunpack.c.h.b16 %v88
    %v556 = vpack.c.b16 %v496, %v492
    %v557 = vpack.c.b16 %v497, %v493
    %v558 = vpack.c.b16 %v498, %v494
    %v559 = vpack.c.b16 %v499, %v495
    %v560 = vpack.c.b16 %v504, %v500
    %v561 = vpack.c.b16 %v505, %v501
    %v562 = vpack.c.b16 %v506, %v502
    %v563 = vpack.c.b16 %v507, %v503
    %v564 = vpack.c.b16 %v512, %v508
    %v565 = vpack.c.b16 %v513, %v509
    %v566 = vpack.c.b16 %v514, %v510
    %v567 = vpack.c.b16 %v515, %v511
    %v568 = vpack.c.b16 %v520, %v516
    %v569 = vpack.c.b16 %v521, %v517
    %v570 = vpack.c.b16 %v522, %v518
    %v571 = vpack.c.b16 %v523, %v519
    %v572 = vpack.c.b16 %v528, %v524
    %v573 = vpack.c.b16 %v529, %v525
    %v574 = vpack.c.b16 %v530, %v526
    %v575 = vpack.c.b16 %v531, %v527
    %v576 = vpack.c.b16 %v536, %v532
    %v577 = vpack.c.b16 %v537, %v533
    %v578 = vpack.c.b16 %v538, %v534
    %v579 = vpack.c.b16 %v539, %v535
    %v580 = vpack.c.b16 %v544, %v540
    %v581 = vpack.c.b16 %v545, %v541
    %v582 = vpack.c.b16 %v546, %v542
    %v583 = vpack.c.b16 %v547, %v543
    %v584 = vpack.c.b16 %v552, %v548
    %v585 = vpack.c.b16 %v553, %v549
    %v586 = vpack.c.b16 %v554, %v550
    %v587 = vpack.c.b16 %v555, %v551
    %620 = vmatprep.subr.bf16.mxu0 %v585
    %621 = vmatpush1.bf16.msra.mxu0 %v584
    %622 = vmatprep.subr.bf16.mxu0 %v581
    %623 = vmatpush1.bf16.msra.mxu0 %v580
    %624 = vmatprep.subr.bf16.mxu0 %v577
    %625 = vmatpush1.bf16.msra.mxu0 %v576
    %626 = vmatprep.subr.bf16.mxu0 %v573
    %627 = vmatpush1.bf16.msra.mxu0 %v572
    %628 = vmatprep.subr.bf16.mxu0 %v569
    %629 = vmatpush1.bf16.msra.mxu0 %v568
    %630 = vmatprep.subr.bf16.mxu0 %v565
    %631 = vmatpush1.bf16.msra.mxu0 %v564
    %632 = vmatprep.subr.bf16.mxu0 %v561
    %633 = vmatpush1.bf16.msra.mxu0 %v560
    %634 = vmatprep.subr.bf16.mxu0 %v557
    %635 = vmatpush1.bf16.msra.mxu0 %v556
    %636 = vmatprep.subr.bf16.mxu0 0
    %637 = vmatpush2.bf16.msra.mxu0 0
    %638 = vmatprep.subr.bf16.mxu0 0
    %639 = vmatpush2.bf16.msra.mxu0 0
    %640 = vmatprep.subr.bf16.mxu0 0
    %641 = vmatpush2.bf16.msra.mxu0 0
    %642 = vmatprep.subr.bf16.mxu0 0
    %643 = vmatpush2.bf16.msra.mxu0 0
    %644 = vmatprep.subr.bf16.mxu0 0
    %645 = vmatpush2.bf16.msra.mxu0 0
    %646 = vmatprep.subr.bf16.mxu0 0
    %647 = vmatpush2.bf16.msra.mxu0 0
    %648 = vmatprep.subr.bf16.mxu0 0
    %649 = vmatpush2.bf16.msra.mxu0 0
    %650 = vmatprep.subr.bf16.mxu0 0
    %651 = vmatpush2.bf16.msra.mxu0 0
    %652 = vmatprep.mubr.bf16.mxu0 0
    %653 = vmatmul.mubr.bf16.gmra.mxu0 %v459
    %v654 = vpop.f32.mrf.mxu0
    %v655 = vadd.f32 0.0, %v654
    %v656 = vpop.f32.mrf.mxu0
    %v657 = vadd.f32 0.0, %v656
    %v658 = vpop.f32.mrf.mxu0
    %v659 = vpop.f32.mrf.mxu0
    %660 = vdwg.mxu0
    %661 = vmatprep.subr.bf16.mxu0 %v587
    %662 = vmatpush1.bf16.msra.mxu0 %v586
    %663 = vmatprep.subr.bf16.mxu0 %v583
    %664 = vmatpush1.bf16.msra.mxu0 %v582
    %665 = vmatprep.subr.bf16.mxu0 %v579
    %666 = vmatpush1.bf16.msra.mxu0 %v578
    %667 = vmatprep.subr.bf16.mxu0 %v575
    %668 = vmatpush1.bf16.msra.mxu0 %v574
    %669 = vmatprep.subr.bf16.mxu0 %v571
    %670 = vmatpush1.bf16.msra.mxu0 %v570
    %671 = vmatprep.subr.bf16.mxu0 %v567
    %672 = vmatpush1.bf16.msra.mxu0 %v566
    %673 = vmatprep.subr.bf16.mxu0 %v563
    %674 = vmatpush1.bf16.msra.mxu0 %v562
    %675 = vmatprep.subr.bf16.mxu0 %v559
    %676 = vmatpush1.bf16.msra.mxu0 %v558
    %677 = vmatprep.subr.bf16.mxu0 0
    %678 = vmatpush2.bf16.msra.mxu0 0
    %679 = vmatprep.subr.bf16.mxu0 0
    %680 = vmatpush2.bf16.msra.mxu0 0
    %681 = vmatprep.subr.bf16.mxu0 0
    %682 = vmatpush2.bf16.msra.mxu0 0
    %683 = vmatprep.subr.bf16.mxu0 0
    %684 = vmatpush2.bf16.msra.mxu0 0
    %685 = vmatprep.subr.bf16.mxu0 0
    %686 = vmatpush2.bf16.msra.mxu0 0
    %687 = vmatprep.subr.bf16.mxu0 0
    %688 = vmatpush2.bf16.msra.mxu0 0
    %689 = vmatprep.subr.bf16.mxu0 0
    %690 = vmatpush2.bf16.msra.mxu0 0
    %691 = vmatprep.subr.bf16.mxu0 0
    %692 = vmatpush2.bf16.msra.mxu0 0
    %693 = vmatprep.mubr.bf16.mxu0 0
    %694 = vmatmul.mubr.bf16.gmra.mxu0 %v459
    %v695 = vpop.f32.mrf.mxu0
    %v696 = vadd.f32 0.0, %v695
    %v697 = vpop.f32.mrf.mxu0
    %v698 = vadd.f32 0.0, %v697
    %v699 = vpop.f32.mrf.mxu0
    %v700 = vpop.f32.mrf.mxu0
    %701 = vdwg.mxu0
    %v702 = vadd.f32 %v307, %v655
    %v703 = vadd.f32 %v309, %v657
    %v704 = vadd.f32 %v348, %v696
    %v705 = vadd.f32 %v350, %v698
    %v706 = vxor.u32 %v702, 2147483648
    %v707 = vmul.f32 %v706, 1.442695
    %v708 = vpow.pop %v707
    %v709 = vadd.f32 %v708, 1.0
    %v710 = vrcp.pop %v709
    %v711 = vmul.f32 1.0, %v710
    %v712 = vxor.u32 %v703, 2147483648
    %v713 = vmul.f32 %v712, 1.442695
    %v714 = vpow.pop %v713
    %v715 = vadd.f32 %v714, 1.0
    %v716 = vrcp.pop %v715
    %v717 = vmul.f32 1.0, %v716
    %v718 = vtanh.pop %v704
    %v719 = vxor.u32 %v705, 2147483648
    %v720 = vmul.f32 %v719, 1.442695
    %v721 = vpow.pop %v720
    %v722 = vadd.f32 %v721, 1.0
    %v723 = vrcp.pop %v722
    %v724 = vmul.f32 1.0, %v723
    %v725 = vmul.f32 %v717, 0.0
    %v726 = vmul.f32 %v711, %v718
    %v727 = vadd.f32 %v725, %v726
    %v728 = vtanh.pop %v727
    %v729 = vmul.f32 %v724, %v728
    %v730 = vadd.f32 %v729, %v24
    %v731 = vpack.c.bf16 %v730, %v730
    %732 = vmatprep.subr.bf16.mxu0 0
    %733 = vmatpush1.bf16.xpose.msra.mxu0 0
    %734 = vmatprep.subr.bf16.mxu0 0
    %735 = vmatpush1.bf16.xpose.msra.mxu0 0
    %736 = vmatprep.subr.bf16.mxu0 0
    %737 = vmatpush1.bf16.xpose.msra.mxu0 0
    %738 = vmatprep.subr.bf16.mxu0 0
    %739 = vmatpush1.bf16.xpose.msra.mxu0 0
    %740 = vmatprep.subr.bf16.mxu0 0
    %741 = vmatpush1.bf16.xpose.msra.mxu0 0
    %742 = vmatprep.subr.bf16.mxu0 0
    %743 = vmatpush1.bf16.xpose.msra.mxu0 0
    %744 = vmatprep.subr.bf16.mxu0 0
    %745 = vmatpush1.bf16.xpose.msra.mxu0 0
    %746 = vmatprep.subr.bf16.mxu0 0
    %747 = vmatpush1.bf16.xpose.msra.mxu0 %v360
    %748 = vmatprep.subr.bf16.mxu0 0
    %749 = vmatpush2.bf16.xpose.msra.mxu0 0
    %750 = vmatprep.subr.bf16.mxu0 0
    %751 = vmatpush2.bf16.xpose.msra.mxu0 0
    %752 = vmatprep.subr.bf16.mxu0 0
    %753 = vmatpush2.bf16.xpose.msra.mxu0 0
    %754 = vmatprep.subr.bf16.mxu0 0
    %755 = vmatpush2.bf16.xpose.msra.mxu0 0
    %756 = vmatprep.subr.bf16.mxu0 0
    %757 = vmatpush2.bf16.xpose.msra.mxu0 0
    %758 = vmatprep.subr.bf16.mxu0 0
    %759 = vmatpush2.bf16.xpose.msra.mxu0 0
    %760 = vmatprep.subr.bf16.mxu0 0
    %761 = vmatpush2.bf16.xpose.msra.mxu0 0
    %762 = vmatprep.subr.bf16.mxu0 0
    %763 = vmatpush2.bf16.xpose.msra.mxu0 0
    %764 = vmatprep.mubr.bf16.mxu0 0
    %765 = vmatmul.mubr.bf16.gmra.mxu0 %v731
    %v766 = vpop.f32.mrf.mxu0
    %v767 = vadd.f32 0.0, %v766
    %v768 = vpop.f32.mrf.mxu0
    %v769 = vpop.f32.mrf.mxu0
    %v770 = vpop.f32.mrf.mxu0
    %771 = vdwg.mxu0
    %v772 = vsel %vm402, %v767, -inf
    %773 = vmax.xlane.f32.xlu0 %v772
    %v774 = vpop.xlane.xlu0 %773
    %v775 = vsub.f32 %v767, %v774
    %v776 = vmul.f32 %v775, 1.442695
    %v777 = vpow.pop %v776
    %v778 = vsel %vm402, %v777, 0.0
    %779 = vadd.xlane.f32.xlu0 %v778
    %v780 = vpop.xlane.xlu0 %779
    %v781 = vrcp.pop %v780
    %v782 = vmul.f32 %v777, %v781
    %v783 = vpack.c.bf16 %v782, %v782
    %v785 = vsel %vm402, %v783, 0
    %787 = vmatprep.subr.bf16.mxu0 0
    %788 = vmatpush1.bf16.msra.mxu0 0
    %789 = vmatprep.subr.bf16.mxu0 0
    %790 = vmatpush1.bf16.msra.mxu0 0
    %791 = vmatprep.subr.bf16.mxu0 0
    %792 = vmatpush1.bf16.msra.mxu0 0
    %793 = vmatprep.subr.bf16.mxu0 0
    %794 = vmatpush1.bf16.msra.mxu0 0
    %795 = vmatprep.subr.bf16.mxu0 0
    %796 = vmatpush1.bf16.msra.mxu0 0
    %797 = vmatprep.subr.bf16.mxu0 0
    %798 = vmatpush1.bf16.msra.mxu0 0
    %799 = vmatprep.subr.bf16.mxu0 0
    %800 = vmatpush1.bf16.msra.mxu0 0
    %801 = vmatprep.subr.bf16.mxu0 0
    %802 = vmatpush1.bf16.msra.mxu0 %v360
    %803 = vmatprep.subr.bf16.mxu0 0
    %804 = vmatpush2.bf16.msra.mxu0 0
    %805 = vmatprep.subr.bf16.mxu0 0
    %806 = vmatpush2.bf16.msra.mxu0 0
    %807 = vmatprep.subr.bf16.mxu0 0
    %808 = vmatpush2.bf16.msra.mxu0 0
    %809 = vmatprep.subr.bf16.mxu0 0
    %810 = vmatpush2.bf16.msra.mxu0 0
    %811 = vmatprep.subr.bf16.mxu0 0
    %812 = vmatpush2.bf16.msra.mxu0 0
    %813 = vmatprep.subr.bf16.mxu0 0
    %814 = vmatpush2.bf16.msra.mxu0 0
    %815 = vmatprep.subr.bf16.mxu0 0
    %816 = vmatpush2.bf16.msra.mxu0 0
    %817 = vmatprep.subr.bf16.mxu0 0
    %818 = vmatpush2.bf16.msra.mxu0 0
    %819 = vmatprep.mubr.bf16.mxu0 0
    %820 = vmatmul.mubr.bf16.gmra.mxu0 %v785
    %v821 = vpop.f32.mrf.mxu0
    %v822 = vadd.f32 0.0, %v821
    %v823 = vpop.f32.mrf.mxu0
    %v824 = vpop.f32.mrf.mxu0
    %v825 = vpop.f32.mrf.mxu0
    %826 = vdwg.mxu0
    %v827 = vadd.f32 %v730, %v822
    %v828 = vpack.c.bf16 %v827, %v827
    %829 = vmatprep.subr.bf16.mxu0 %v585
    %830 = vmatpush1.bf16.msra.mxu0 %v584
    %831 = vmatprep.subr.bf16.mxu0 %v581
    %832 = vmatpush1.bf16.msra.mxu0 %v580
    %833 = vmatprep.subr.bf16.mxu0 %v577
    %834 = vmatpush1.bf16.msra.mxu0 %v576
    %835 = vmatprep.subr.bf16.mxu0 %v573
    %836 = vmatpush1.bf16.msra.mxu0 %v572
    %837 = vmatprep.subr.bf16.mxu0 %v569
    %838 = vmatpush1.bf16.msra.mxu0 %v568
    %839 = vmatprep.subr.bf16.mxu0 %v565
    %840 = vmatpush1.bf16.msra.mxu0 %v564
    %841 = vmatprep.subr.bf16.mxu0 %v561
    %842 = vmatpush1.bf16.msra.mxu0 %v560
    %843 = vmatprep.subr.bf16.mxu0 %v557
    %844 = vmatpush1.bf16.msra.mxu0 %v556
    %845 = vmatprep.subr.bf16.mxu0 0
    %846 = vmatpush2.bf16.msra.mxu0 0
    %847 = vmatprep.subr.bf16.mxu0 0
    %848 = vmatpush2.bf16.msra.mxu0 0
    %849 = vmatprep.subr.bf16.mxu0 0
    %850 = vmatpush2.bf16.msra.mxu0 0
    %851 = vmatprep.subr.bf16.mxu0 0
    %852 = vmatpush2.bf16.msra.mxu0 0
    %853 = vmatprep.subr.bf16.mxu0 0
    %854 = vmatpush2.bf16.msra.mxu0 0
    %855 = vmatprep.subr.bf16.mxu0 0
    %856 = vmatpush2.bf16.msra.mxu0 0
    %857 = vmatprep.subr.bf16.mxu0 0
    %858 = vmatpush2.bf16.msra.mxu0 0
    %859 = vmatprep.subr.bf16.mxu0 0
    %860 = vmatpush2.bf16.msra.mxu0 0
    %861 = vmatprep.mubr.bf16.mxu0 0
    %862 = vmatmul.mubr.bf16.gmra.mxu0 %v828
    %v863 = vpop.f32.mrf.mxu0
    %v864 = vadd.f32 0.0, %v863
    %v865 = vpop.f32.mrf.mxu0
    %v866 = vadd.f32 0.0, %v865
    %v867 = vpop.f32.mrf.mxu0
    %v868 = vpop.f32.mrf.mxu0
    %869 = vdwg.mxu0
    %870 = vmatprep.subr.bf16.mxu0 %v587
    %871 = vmatpush1.bf16.msra.mxu0 %v586
    %872 = vmatprep.subr.bf16.mxu0 %v583
    %873 = vmatpush1.bf16.msra.mxu0 %v582
    %874 = vmatprep.subr.bf16.mxu0 %v579
    %875 = vmatpush1.bf16.msra.mxu0 %v578
    %876 = vmatprep.subr.bf16.mxu0 %v575
    %877 = vmatpush1.bf16.msra.mxu0 %v574
    %878 = vmatprep.subr.bf16.mxu0 %v571
    %879 = vmatpush1.bf16.msra.mxu0 %v570
    %880 = vmatprep.subr.bf16.mxu0 %v567
    %881 = vmatpush1.bf16.msra.mxu0 %v566
    %882 = vmatprep.subr.bf16.mxu0 %v563
    %883 = vmatpush1.bf16.msra.mxu0 %v562
    %884 = vmatprep.subr.bf16.mxu0 %v559
    %885 = vmatpush1.bf16.msra.mxu0 %v558
    %886 = vmatprep.subr.bf16.mxu0 0
    %887 = vmatpush2.bf16.msra.mxu0 0
    %888 = vmatprep.subr.bf16.mxu0 0
    %889 = vmatpush2.bf16.msra.mxu0 0
    %890 = vmatprep.subr.bf16.mxu0 0
    %891 = vmatpush2.bf16.msra.mxu0 0
    %892 = vmatprep.subr.bf16.mxu0 0
    %893 = vmatpush2.bf16.msra.mxu0 0
    %894 = vmatprep.subr.bf16.mxu0 0
    %895 = vmatpush2.bf16.msra.mxu0 0
    %896 = vmatprep.subr.bf16.mxu0 0
    %897 = vmatpush2.bf16.msra.mxu0 0
    %898 = vmatprep.subr.bf16.mxu0 0
    %899 = vmatpush2.bf16.msra.mxu0 0
    %900 = vmatprep.subr.bf16.mxu0 0
    %901 = vmatpush2.bf16.msra.mxu0 0
    %902 = vmatprep.mubr.bf16.mxu0 0
    %903 = vmatmul.mubr.bf16.gmra.mxu0 %v828
    %v904 = vpop.f32.mrf.mxu0
    %v905 = vadd.f32 0.0, %v904
    %v906 = vpop.f32.mrf.mxu0
    %v907 = vadd.f32 0.0, %v906
    %v908 = vpop.f32.mrf.mxu0
    %v909 = vpop.f32.mrf.mxu0
    %910 = vdwg.mxu0
    %v911 = vadd.f32 %v307, %v864
    %v912 = vadd.f32 %v309, %v866
    %v913 = vadd.f32 %v348, %v905
    %v914 = vadd.f32 %v350, %v907
    %v915 = vxor.u32 %v911, 2147483648
    %v916 = vmul.f32 %v915, 1.442695
    %v917 = vpow.pop %v916
    %v918 = vadd.f32 %v917, 1.0
    %v919 = vrcp.pop %v918
    %v920 = vmul.f32 1.0, %v919
    %v921 = vxor.u32 %v912, 2147483648
    %v922 = vmul.f32 %v921, 1.442695
    %v923 = vpow.pop %v922
    %v924 = vadd.f32 %v923, 1.0
    %v925 = vrcp.pop %v924
    %v926 = vmul.f32 1.0, %v925
    %v927 = vtanh.pop %v913
    %v928 = vxor.u32 %v914, 2147483648
    %v929 = vmul.f32 %v928, 1.442695
    %v930 = vpow.pop %v929
    %v931 = vadd.f32 %v930, 1.0
    %v932 = vrcp.pop %v931
    %v933 = vmul.f32 1.0, %v932
    %v934 = vmul.f32 %v926, %v727
    %v935 = vmul.f32 %v920, %v927
    %v936 = vadd.f32 %v934, %v935
    %v937 = vtanh.pop %v936
    %v938 = vmul.f32 %v933, %v937
    %v939 = vadd.f32 %v938, %v24
    %940 = vst [vmem:[#allocation2] sm:$0xff] %v939
    // Predicated region
    $region22: #{attention_lstm.1} parent=1 // pred_check
      _
    $region23: #{attention_lstm.1} parent=1 // pred_check_branch
      %942 = sbr.rel (0) target = $region25
    $region24: #{attention_lstm.1} parent=1 // pred_region
      %s944 = ssub.s32 128, 128
      %945 = vsyncadd [#allocation3], %s944
      %s947 = sshll.u32 [#allocation2], 4
      %s948 = int_to_ptr.vmem [resolvable:$true] %s947
      %950 = dma.vmem_to_hbm [thread:$0]  %s948, 128, %s5, [#allocation3]
    $region25: #{attention_lstm.1} parent=1 // pred_fallthru
      _
    // Predicated region
    $region26: #{attention_lstm.1} parent=1 // pred_check
      _
    $region27: #{attention_lstm.1} parent=1 // pred_check_branch
      %952 = sbr.rel (0) target = $region29
    $region28: #{attention_lstm.1} parent=1 // pred_region
      %953 = dma.done [#allocation3], 128
    $region29: #{attention_lstm.1} parent=1 // pred_fallthru
      _
    %954 = vsyncpa [#allocation3], 1

</llo_original>
